<compile_context>
chip_gen: v5e
topology: v5e:2x2
jax: 0.10.0
libtpu: 0.0.40
codegen_flags: <defaults>
</compile_context>

<pallas_src>
import jax
import jax.numpy as jnp
import numpy as np
from jax.experimental import pallas as pl
from jax.experimental.pallas import tpu as pltpu


def _multi_loss_kernel(packed_ref, out_ref):
    # packed_ref: (2, n_used) f32 in VMEM. Row 0 = losses, row 1 = log_vars.
    losses = packed_ref[0:1, :]                 # (1, n_used)
    log_vars = packed_ref[1:2, :]               # (1, n_used)
    precisions = jnp.exp(-log_vars)             # EUP transcendental
    terms = losses * precisions + log_vars      # VPU elementwise
    out_ref[0, 0] = jnp.sum(terms)              # XLU reduce -> scalar SMEM store


def custom_multi_loss(loss_list, log_vars):
    """loss_list: list of scalar f32 values; log_vars: (loss_num,) f32 parameter."""
    loss_num = log_vars.shape[0]
    n_used = len(loss_list)
    assert n_used <= loss_num

    if n_used == 0:
        # Matches the PyTorch module: empty loop -> loss = 0.
        return jnp.float32(0.0)

    # Only the first n_used entries of log_vars participate (static Python int),
    # so slice instead of masking: no mask input, no padded slots.
    losses = jnp.stack([jnp.asarray(l, jnp.float32).reshape(()) for l in loss_list])
    packed = jnp.stack([losses, log_vars[:n_used].astype(jnp.float32)], axis=0)  # (2, n_used)

    out = pl.pallas_call(
        _multi_loss_kernel,
        out_shape=jax.ShapeDtypeStruct((1, 1), jnp.float32),
        in_specs=[pl.BlockSpec(memory_space=pltpu.MemorySpace.VMEM)],
        out_specs=pl.BlockSpec(memory_space=pltpu.MemorySpace.SMEM),
        cost_estimate=pl.CostEstimate(
            flops=4 * n_used,
            transcendentals=n_used,
            bytes_accessed=8 * n_used + 4,
        ),
    )(packed)
    return out[0, 0]


if __name__ == "__main__":
    key = jax.random.PRNGKey(0)
    loss_num = 6          # module __init__(loss_num=6)
    n_used = 4            # len(loss_list) <= loss_num

    k_loss, k_lv = jax.random.split(key)
    # The module initializes log_vars to zeros; use a small random perturbation
    # so exp(-log_vars) is non-trivial.
    log_vars = 0.1 * jax.random.normal(k_lv, (loss_num,), jnp.float32)
    raw_losses = jax.random.uniform(k_loss, (n_used,), jnp.float32, 0.1, 2.0)
    loss_list = [raw_losses[i] for i in range(n_used)]

    result = custom_multi_loss(loss_list, log_vars)
    result = jax.block_until_ready(result)

    # Pure-JAX reference for correctness.
    precisions = jnp.exp(-log_vars)
    ref = 0.0
    for i in range(n_used):
        ref = ref + loss_list[i] * precisions[i] + log_vars[i]
    np.testing.assert_allclose(np.asarray(result), np.asarray(ref), rtol=1e-6, atol=1e-6)

    print("KERNEL_OK")
</pallas_src>

<mosaic_0001>
module attributes {stable_mosaic.version = 11 : i64} {
  func.func @_multi_loss_kernel(%arg0: memref<2x4xf32, #tpu.memory_space<vmem>>, %arg1: memref<1x1xf32, #tpu.memory_space<smem>>) attributes {dimension_semantics = [], scalar_prefetch = 0 : i64, scratch_operands = 0 : i64, tpu.core_type = #tpu.core_type<tc>} {
    %c0 = arith.constant 0 : index
    %c0_0 = arith.constant 0 : index
    %0 = vector.load %arg0[%c0, %c0_0] : memref<2x4xf32, #tpu.memory_space<vmem>>, vector<1x4xf32>
    %c1 = arith.constant 1 : index
    %c0_1 = arith.constant 0 : index
    %1 = vector.load %arg0[%c1, %c0_1] : memref<2x4xf32, #tpu.memory_space<vmem>>, vector<1x4xf32>
    %cst = arith.constant 0.000000e+00 : f32
    %2 = vector.broadcast %cst : f32 to vector<1x4xf32>
    %3 = arith.subf %2, %1 : vector<1x4xf32>
    %4 = math.exp %3 : vector<1x4xf32>
    %5 = arith.mulf %0, %4 : vector<1x4xf32>
    %6 = arith.addf %5, %1 : vector<1x4xf32>
    %7 = vector.shape_cast %6 : vector<1x4xf32> to vector<1x1x4xf32>
    %cst_2 = arith.constant dense<0.000000e+00> : vector<1xf32>
    %8 = vector.multi_reduction <add>, %7, %cst_2 [1, 2] : vector<1x1x4xf32> to vector<1xf32>
    %9 = vector.shape_cast %8 : vector<1xf32> to vector<1x1x1xf32>
    %10 = vector.extract %9[0, 0, 0] : f32 from vector<1x1x1xf32>
    %c0_3 = arith.constant 0 : index
    %c0_4 = arith.constant 0 : index
    %11 = memref.load %arg1[%c0_3, %c0_4] : memref<1x1xf32, #tpu.memory_space<smem>>
    memref.store %10, %arg1[%c0_3, %c0_4] : memref<1x1xf32, #tpu.memory_space<smem>>
    return
  }
}

</mosaic_0001>

<llo_original>
// kernel: tpu_custom_call.1
$region0: #{tpu_custom_call.1}
  #allocation0 [shape = 'u32[]', space=smem, size = 0x4, offset = 0x4, fixed_abs, tag = 'smem constant byte address 0x4 - core index']
  #allocation1 [shape = 'u32[72,128]{1,0:T(1,128)}', space=vmem, size = 0x9000, scoped, tag = 'internal scratch']
  %s0 = inlined_call_operand.hbm [shape: f32[2,4], index: 0, kind: input, shape index: {}]
  %s1 = inlined_call_operand.hbm [shape: f32[1,1], index: 1, kind: output, shape index: {}]
  %s2 = sld [smem:[#allocation0]]
  $region18: #{tpu_custom_call.1} parent=0
    _
  %s4 = ssub.s32 1, %s2
  %s5 = scalar_select 0, %s4, %s2
  $region1: #{tpu_custom_call.1} parent=0
    #allocation2 [shape = 'u8[1024]{0}', space=vmem, size = 0x400, scoped, tag = 'input window, operand 0, single buffered']
    #allocation3 [shape = 's32[1]{0}', space=sflag, size = 0x4, scoped, tag = 'scoped memory for tpu_custom_call.1']
    #allocation4 [shape = 's32[1]{0}', space=sflag, size = 0x4, scoped, tag = 'scoped memory for tpu_custom_call.1']
    #allocation5 [shape = 'u8[512]{0}', space=smem, size = 0x200, scoped, tag = 'output window, operand 0, single buffered']
    %6 = vsyncpa [#allocation3], 0
    %7 = vsyncpa [#allocation4], 0
    // Predicated region
    $region2: #{tpu_custom_call.1} parent=1 // pred_check
      _
    $region3: #{tpu_custom_call.1} parent=1 // pred_check_branch
      %9 = sbr.rel (0) target = $region5
    $region4: #{tpu_custom_call.1} parent=1 // pred_region
      %11 = vsyncadd [#allocation3], 0
      %s13 = sshll.u32 %s0, 4
      %s14 = int_to_ptr.hbm [resolvable:$true] %s13
      %s15 = sshll.u32 [#allocation2], 4
      %s16 = int_to_ptr.vmem [resolvable:$true] %s15
      %18 = dma.hbm_to_vmem [thread:$0]  %s14, 32, %s16, [#allocation3]
    $region5: #{tpu_custom_call.1} parent=1 // pred_fallthru
      _
    // Predicated region
    $region6: #{tpu_custom_call.1} parent=1 // pred_check
      _
    $region7: #{tpu_custom_call.1} parent=1 // pred_check_branch
      %20 = sbr.rel (0) target = $region9
    $region8: #{tpu_custom_call.1} parent=1 // pred_region
      %22 = dma.done [#allocation3], 32
    $region9: #{tpu_custom_call.1} parent=1 // pred_fallthru
      _
    %v23 = vld [vmem:[#allocation2] sm:$0x1]
    %v24 = vld [vmem:[#allocation2 + $0x1] sm:$0x1]
    %v25 = vsub.f32 0.0, %v24
    %v26 = vmul.f32 %v25, 1.442695
    %v27 = vpow.pop %v26
    %v28 = vmul.f32 %v23, %v27
    %v29 = vadd.f32 %v28, %v24
    %vm30 = vcmask 24576
    %v31 = vsel %vm30, %v29, 0.0
    %32 = vadd.xlane.f32.xlu0 %v31
    %v33 = vpop.xlane.xlu0 %32
    %v34 = vrot.slane %v33, 4
    %v35 = vadd.f32 %v33, %v34
    %v36 = vrot.slane %v35, 2
    %v37 = vadd.f32 %v35, %v36
    %v38 = vrot.slane %v37, 1
    %v39 = vadd.f32 %v37, %v38
    %s40 = vtos %v39
    %s41 = scalar_lea.smem [#allocation5], 0
    %42 = sst [smem:[%s41]] %s40
    // Predicated region
    $region10: #{tpu_custom_call.1} parent=1 // pred_check
      _
    $region11: #{tpu_custom_call.1} parent=1 // pred_check_branch
      %44 = sbr.rel (0) target = $region13
    $region12: #{tpu_custom_call.1} parent=1 // pred_region
      %46 = vsyncadd [#allocation4], 0
      %s48 = sshll.u32 %s1, 4
      %s49 = int_to_ptr.hbm [resolvable:$true] %s48
      %51 = dma.smem_to_hbm [#allocation5], 16, %s49, [#allocation4]
    $region13: #{tpu_custom_call.1} parent=1 // pred_fallthru
      _
    // Predicated region
    $region14: #{tpu_custom_call.1} parent=1 // pred_check
      _
    $region15: #{tpu_custom_call.1} parent=1 // pred_check_branch
      %53 = sbr.rel (0) target = $region17
    $region16: #{tpu_custom_call.1} parent=1 // pred_region
      %55 = dma.done [#allocation4], 16
    $region17: #{tpu_custom_call.1} parent=1 // pred_fallthru
      _
    %56 = sfence
    %57 = vsyncpa [#allocation3], 1
    %58 = vsyncpa [#allocation4], 1

</llo_original>
